<compile_context>
chip_gen: v7x
topology: tpu7x:2x2x1
jax: 0.10.0
libtpu: 0.0.40
codegen_flags: <defaults>
</compile_context>

<pallas_src>
from math import sqrt

import jax
import jax.numpy as jnp
from jax.experimental import pallas as pl
from jax.experimental.pallas import tpu as pltpu

DROPOUT_P = 0.5  # keep probability = 0.5 -> one bit test per element
_LAYER_STRIDE = 512  # > (256 + 128): unique per-element counters across layers


def _round_up(n, m):
    return (n + m - 1) // m * m


def _keep_mask(row0, tm, n, layer, seed):
    """Boolean keep-mask (p_keep = 0.5) from a counter-based integer hash.

    Portable (pure jnp/lax) replacement for the TPU hardware PRNG; runs on the
    VPU on TPU and also lowers in interpret mode.
    """
    rows = row0 + jax.lax.broadcasted_iota(jnp.int32, (tm, n), 0)
    cols = jax.lax.broadcasted_iota(jnp.int32, (tm, n), 1)
    ctr = rows * _LAYER_STRIDE + cols + layer * 256  # unique per (row, col, layer)
    x = ctr.astype(jnp.uint32) ^ seed.astype(jnp.uint32)
    # murmur3-style finalizer (wrapping uint32 arithmetic)
    x = x * jnp.uint32(0x9E3779B9)
    x = x ^ (x >> 16)
    x = x * jnp.uint32(0x85EBCA6B)
    x = x ^ (x >> 13)
    x = x * jnp.uint32(0xC2B2AE35)
    x = x ^ (x >> 16)
    return x >= jnp.uint32(0x80000000)  # top bit -> p(keep) = 0.5


def prenet_kernel(seed_ref, x_ref, w1_ref, b1_ref, w2_ref, b2_ref, o_ref):
    seed = seed_ref[0]
    tm = x_ref.shape[0]
    row0 = pl.program_id(0) * tm  # global row offset -> decorrelated masks per tile

    # ---- layer 1: linear -> fused(relu + dropout mask) ---------------------
    # bf16 MXU inputs, f32 accumulation; the 1/(1-p)=2 scale for this layer is
    # folded into w2 by the wrapper, so only the keep-mask is applied here.
    h = jnp.dot(x_ref[...].astype(jnp.bfloat16), w1_ref[...],
                preferred_element_type=jnp.float32)
    h = h + b1_ref[...]
    keep1 = _keep_mask(row0, tm, h.shape[1], 0, seed)
    h = jnp.where(keep1 & (h > 0.0), h, 0.0)

    # ---- layer 2: linear -> fused(relu + dropout + 1/(1-p) scale) ----------
    h = jnp.dot(h.astype(jnp.bfloat16), w2_ref[...],
                preferred_element_type=jnp.float32)
    h = h + b2_ref[...]
    keep2 = _keep_mask(row0, tm, h.shape[1], 1, seed)
    h = jnp.where(keep2 & (h > 0.0), h * (1.0 / (1.0 - DROPOUT_P)), 0.0)

    o_ref[...] = h.astype(o_ref.dtype)


def prenet_forward(x, w1, b1, w2, b2, seed, *, block_rows=256):
    """Prenet forward.

    x    : (..., in_dim) f32 — leading dims are flattened into the row axis.
    w1   : (in_dim, 256) f32 (pre-transposed);  b1: (1, 256) f32
    w2   : (256, 128)    f32 (pre-transposed);  b2: (1, 128) f32
    seed : (1,) int32 — dropout PRNG seed.
    """
    lead_shape = x.shape[:-1]
    in_dim = x.shape[-1]
    h1 = w1.shape[1]
    out_dim = w2.shape[1]

    # Flatten all leading dims into the matmul M dimension.
    x2 = x.reshape(-1, in_dim)
    rows = x2.shape[0]

    # bf16 weights for the MXU; fold the layer-1 dropout scale 2.0 into w2
    # (exact in bf16 — exponent-only change).
    w1_bf = w1.astype(jnp.bfloat16)
    w2_bf = (w2 * (1.0 / (1.0 - DROPOUT_P))).astype(jnp.bfloat16)

    # Row tile: big enough to pipeline / use the MXU, small enough for v7x's
    # 64 MiB VMEM (per tile: x + out + intermediates << 1 MiB at tm=256).
    tm = min(block_rows, _round_up(rows, 8))
    rows_p = _round_up(rows, tm)
    if rows_p != rows:
        x2 = jnp.pad(x2, ((0, rows_p - rows), (0, 0)))

    grid_spec = pltpu.PrefetchScalarGridSpec(
        num_scalar_prefetch=1,  # seed lives in SMEM
        grid=(rows_p // tm,),
        in_specs=[
            pl.BlockSpec((tm, in_dim), lambda i, s: (i, 0)),   # x row tile
            pl.BlockSpec((in_dim, h1), lambda i, s: (0, 0)),   # w1 (resident)
            pl.BlockSpec((1, h1), lambda i, s: (0, 0)),        # b1 (resident)
            pl.BlockSpec((h1, out_dim), lambda i, s: (0, 0)),  # w2 (resident)
            pl.BlockSpec((1, out_dim), lambda i, s: (0, 0)),   # b2 (resident)
        ],
        out_specs=pl.BlockSpec((tm, out_dim), lambda i, s: (i, 0)),
    )

    out = pl.pallas_call(
        prenet_kernel,
        grid_spec=grid_spec,
        out_shape=jax.ShapeDtypeStruct((rows_p, out_dim), jnp.float32),
        compiler_params=pltpu.CompilerParams(
            dimension_semantics=("parallel",)),  # v7x: shard rows over 2 TCs
    )(seed, x2, w1_bf, b1, w2_bf, b2)

    return out[:rows].reshape(*lead_shape, out_dim)


def init_prenet_params(key, in_dim, sizes):
    """Deterministic nn.Linear-style init: U(-1/sqrt(fan_in), 1/sqrt(fan_in))."""
    params = []
    in_sizes = [in_dim] + sizes[:-1]
    for fan_in, fan_out in zip(in_sizes, sizes):
        key, kw, kb = jax.random.split(key, 3)
        bound = 1.0 / sqrt(fan_in)
        # stored transposed: (in, out)
        w = jax.random.uniform(kw, (fan_in, fan_out), jnp.float32, -bound, bound)
        b = jax.random.uniform(kb, (1, fan_out), jnp.float32, -bound, bound)
        params.append((w, b))
    return params


if __name__ == "__main__":
    key = jax.random.PRNGKey(0)
    batch, seq, in_dim = 2, 8, 32
    sizes = [256, 128]

    key, kx = jax.random.split(key)
    x = jax.random.normal(kx, (batch, seq, in_dim), jnp.float32)
    (w1, b1), (w2, b2) = init_prenet_params(key, in_dim, sizes)
    seed = jnp.array([1234], dtype=jnp.int32)

    # TODO(synk): dropout is applied unconditionally (training-mode semantics,
    # as in the classic Tacotron2 prenet); an eval-mode (no-dropout) path is
    # not implemented here.
    out = prenet_forward(x, w1, b1, w2, b2, seed)
    out = jax.block_until_ready(out)

    assert out.shape == (batch, seq, sizes[-1])
    assert out.dtype == jnp.float32
    assert bool(jnp.all(jnp.isfinite(out)))
    # relu + dropout => all outputs non-negative
    assert bool(jnp.all(out >= 0.0))
    # dropout with p=0.5 should zero out a nontrivial fraction of entries
    assert bool(jnp.mean((out == 0.0).astype(jnp.float32)) > 0.25)
    print("KERNEL_OK")
</pallas_src>

<mosaic_0001>
module attributes {stable_mosaic.version = 11 : i64} {
  func.func @prenet_kernel(%arg0: i32, %arg1: memref<1xi32, #tpu.memory_space<smem>>, %arg2: memref<16x32xf32, #tpu.memory_space<vmem>>, %arg3: memref<32x256xbf16, #tpu.memory_space<vmem>>, %arg4: memref<1x256xf32, #tpu.memory_space<vmem>>, %arg5: memref<256x128xbf16, #tpu.memory_space<vmem>>, %arg6: memref<1x128xf32, #tpu.memory_space<vmem>>, %arg7: memref<16x128xf32, #tpu.memory_space<vmem>>) attributes {dimension_semantics = [#tpu.dimension_semantics<parallel>], iteration_bounds = array<i64: 1>, scalar_prefetch = 1 : i64, scratch_operands = 0 : i64, tpu.core_type = #tpu.core_type<tc>, window_params = [{transform_indices = @transform_0, window_bounds = array<i64: 16, 32>}, {pipeline_mode = #tpu.pipeline_mode<synchronous>, transform_indices = @transform_1, window_bounds = array<i64: 32, 256>}, {pipeline_mode = #tpu.pipeline_mode<synchronous>, transform_indices = @transform_2, window_bounds = array<i64: 1, 256>}, {pipeline_mode = #tpu.pipeline_mode<synchronous>, transform_indices = @transform_3, window_bounds = array<i64: 256, 128>}, {pipeline_mode = #tpu.pipeline_mode<synchronous>, transform_indices = @transform_4, window_bounds = array<i64: 1, 128>}, {transform_indices = @transform_5, window_bounds = array<i64: 16, 128>}]} {
    %c0 = arith.constant 0 : index
    %0 = memref.load %arg1[%c0] : memref<1xi32, #tpu.memory_space<smem>>
    %c16_i32 = arith.constant 16 : i32
    %1 = arith.muli %arg0, %c16_i32 : i32
    %c0_0 = arith.constant 0 : index
    %c0_1 = arith.constant 0 : index
    %2 = vector.load %arg2[%c0_0, %c0_1] : memref<16x32xf32, #tpu.memory_space<vmem>>, vector<16x32xf32>
    %3 = arith.truncf %2 : vector<16x32xf32> to vector<16x32xbf16>
    %c0_2 = arith.constant 0 : index
    %c0_3 = arith.constant 0 : index
    %4 = vector.load %arg3[%c0_2, %c0_3] : memref<32x256xbf16, #tpu.memory_space<vmem>>, vector<32x256xbf16>
    %cst = arith.constant dense<0.000000e+00> : vector<16x256xf32>
    %5 = tpu.matmul %3, %4, %cst {dimension_numbers = #tpu.dot_dimension_numbers<[1], [0], [0], [1], [0, 0, 1, 1], [], []>} : vector<16x32xbf16>, vector<32x256xbf16>, vector<16x256xf32> -> vector<16x256xf32>
    %c0_4 = arith.constant 0 : index
    %c0_5 = arith.constant 0 : index
    %6 = vector.load %arg4[%c0_4, %c0_5] : memref<1x256xf32, #tpu.memory_space<vmem>>, vector<1x256xf32>
    %7 = vector.broadcast %6 : vector<1x256xf32> to vector<16x256xf32>
    %8 = arith.addf %5, %7 : vector<16x256xf32>
    %9 = tpu.iota {dimensions = array<i32: 0>} : vector<16x256xi32>
    %10 = vector.broadcast %1 : i32 to vector<16x256xi32>
    %11 = arith.addi %10, %9 : vector<16x256xi32>
    %12 = tpu.iota {dimensions = array<i32: 1>} : vector<16x256xi32>
    %c512_i32 = arith.constant 512 : i32
    %13 = vector.broadcast %c512_i32 : i32 to vector<16x256xi32>
    %14 = arith.muli %11, %13 : vector<16x256xi32>
    %15 = arith.addi %14, %12 : vector<16x256xi32>
    %c0_i32 = arith.constant 0 : i32
    %16 = vector.broadcast %c0_i32 : i32 to vector<16x256xi32>
    %17 = arith.addi %15, %16 : vector<16x256xi32>
    %18 = vector.broadcast %0 : i32 to vector<16x256xi32>
    %19 = arith.xori %17, %18 : vector<16x256xi32>
    %c-1640531527_i32 = arith.constant -1640531527 : i32
    %20 = vector.broadcast %c-1640531527_i32 : i32 to vector<16x256xi32>
    %21 = arith.muli %19, %20 : vector<16x256xi32>
    %c16_i32_6 = arith.constant 16 : i32
    %22 = vector.broadcast %c16_i32_6 : i32 to vector<16x256xi32>
    %23 = arith.shrui %21, %22 : vector<16x256xi32>
    %24 = arith.xori %21, %23 : vector<16x256xi32>
    %c-2048144789_i32 = arith.constant -2048144789 : i32
    %25 = vector.broadcast %c-2048144789_i32 : i32 to vector<16x256xi32>
    %26 = arith.muli %24, %25 : vector<16x256xi32>
    %c13_i32 = arith.constant 13 : i32
    %27 = vector.broadcast %c13_i32 : i32 to vector<16x256xi32>
    %28 = arith.shrui %26, %27 : vector<16x256xi32>
    %29 = arith.xori %26, %28 : vector<16x256xi32>
    %c-1028477387_i32 = arith.constant -1028477387 : i32
    %30 = vector.broadcast %c-1028477387_i32 : i32 to vector<16x256xi32>
    %31 = arith.muli %29, %30 : vector<16x256xi32>
    %c16_i32_7 = arith.constant 16 : i32
    %32 = vector.broadcast %c16_i32_7 : i32 to vector<16x256xi32>
    %33 = arith.shrui %31, %32 : vector<16x256xi32>
    %34 = arith.xori %31, %33 : vector<16x256xi32>
    %c-2147483648_i32 = arith.constant -2147483648 : i32
    %35 = vector.broadcast %c-2147483648_i32 : i32 to vector<16x256xi32>
    %36 = arith.cmpi uge, %34, %35 : vector<16x256xi32>
    %cst_8 = arith.constant 0.000000e+00 : f32
    %37 = vector.broadcast %cst_8 : f32 to vector<16x256xf32>
    %38 = arith.cmpf ogt, %8, %37 : vector<16x256xf32>
    %39 = arith.andi %36, %38 : vector<16x256xi1>
    %cst_9 = arith.constant 0.000000e+00 : f32
    %40 = vector.broadcast %cst_9 : f32 to vector<16x256xf32>
    %41 = arith.select %39, %8, %40 : vector<16x256xi1>, vector<16x256xf32>
    %42 = arith.truncf %41 : vector<16x256xf32> to vector<16x256xbf16>
    %c0_10 = arith.constant 0 : index
    %c0_11 = arith.constant 0 : index
    %43 = vector.load %arg5[%c0_10, %c0_11] : memref<256x128xbf16, #tpu.memory_space<vmem>>, vector<256x128xbf16>
    %cst_12 = arith.constant dense<0.000000e+00> : vector<16x128xf32>
    %44 = tpu.matmul %42, %43, %cst_12 {dimension_numbers = #tpu.dot_dimension_numbers<[1], [0], [0], [1], [0, 0, 1, 1], [], []>} : vector<16x256xbf16>, vector<256x128xbf16>, vector<16x128xf32> -> vector<16x128xf32>
    %c0_13 = arith.constant 0 : index
    %c0_14 = arith.constant 0 : index
    %45 = vector.load %arg6[%c0_13, %c0_14] : memref<1x128xf32, #tpu.memory_space<vmem>>, vector<1x128xf32>
    %46 = vector.broadcast %45 : vector<1x128xf32> to vector<16x128xf32>
    %47 = arith.addf %44, %46 : vector<16x128xf32>
    %48 = tpu.iota {dimensions = array<i32: 0>} : vector<16x128xi32>
    %49 = vector.broadcast %1 : i32 to vector<16x128xi32>
    %50 = arith.addi %49, %48 : vector<16x128xi32>
    %51 = tpu.iota {dimensions = array<i32: 1>} : vector<16x128xi32>
    %c512_i32_15 = arith.constant 512 : i32
    %52 = vector.broadcast %c512_i32_15 : i32 to vector<16x128xi32>
    %53 = arith.muli %50, %52 : vector<16x128xi32>
    %54 = arith.addi %53, %51 : vector<16x128xi32>
    %c256_i32 = arith.constant 256 : i32
    %55 = vector.broadcast %c256_i32 : i32 to vector<16x128xi32>
    %56 = arith.addi %54, %55 : vector<16x128xi32>
    %57 = vector.broadcast %0 : i32 to vector<16x128xi32>
    %58 = arith.xori %56, %57 : vector<16x128xi32>
    %c-1640531527_i32_16 = arith.constant -1640531527 : i32
    %59 = vector.broadcast %c-1640531527_i32_16 : i32 to vector<16x128xi32>
    %60 = arith.muli %58, %59 : vector<16x128xi32>
    %c16_i32_17 = arith.constant 16 : i32
    %61 = vector.broadcast %c16_i32_17 : i32 to vector<16x128xi32>
    %62 = arith.shrui %60, %61 : vector<16x128xi32>
    %63 = arith.xori %60, %62 : vector<16x128xi32>
    %c-2048144789_i32_18 = arith.constant -2048144789 : i32
    %64 = vector.broadcast %c-2048144789_i32_18 : i32 to vector<16x128xi32>
    %65 = arith.muli %63, %64 : vector<16x128xi32>
    %c13_i32_19 = arith.constant 13 : i32
    %66 = vector.broadcast %c13_i32_19 : i32 to vector<16x128xi32>
    %67 = arith.shrui %65, %66 : vector<16x128xi32>
    %68 = arith.xori %65, %67 : vector<16x128xi32>
    %c-1028477387_i32_20 = arith.constant -1028477387 : i32
    %69 = vector.broadcast %c-1028477387_i32_20 : i32 to vector<16x128xi32>
    %70 = arith.muli %68, %69 : vector<16x128xi32>
    %c16_i32_21 = arith.constant 16 : i32
    %71 = vector.broadcast %c16_i32_21 : i32 to vector<16x128xi32>
    %72 = arith.shrui %70, %71 : vector<16x128xi32>
    %73 = arith.xori %70, %72 : vector<16x128xi32>
    %c-2147483648_i32_22 = arith.constant -2147483648 : i32
    %74 = vector.broadcast %c-2147483648_i32_22 : i32 to vector<16x128xi32>
    %75 = arith.cmpi uge, %73, %74 : vector<16x128xi32>
    %cst_23 = arith.constant 0.000000e+00 : f32
    %76 = vector.broadcast %cst_23 : f32 to vector<16x128xf32>
    %77 = arith.cmpf ogt, %47, %76 : vector<16x128xf32>
    %78 = arith.andi %75, %77 : vector<16x128xi1>
    %cst_24 = arith.constant 2.000000e+00 : f32
    %79 = vector.broadcast %cst_24 : f32 to vector<16x128xf32>
    %80 = arith.mulf %47, %79 : vector<16x128xf32>
    %cst_25 = arith.constant 0.000000e+00 : f32
    %81 = vector.broadcast %cst_25 : f32 to vector<16x128xf32>
    %82 = arith.select %78, %80, %81 : vector<16x128xi1>, vector<16x128xf32>
    %c0_26 = arith.constant 0 : index
    %c0_27 = arith.constant 0 : index
    %83 = vector.load %arg7[%c0_26, %c0_27] : memref<16x128xf32, #tpu.memory_space<vmem>>, vector<16x128xf32>
    tpu.vector_store %arg7[%c0_26, %c0_27], %82 {strides = array<i32>} : memref<16x128xf32, #tpu.memory_space<vmem>>, vector<16x128xf32>,
    return
  }
  func.func @transform_0(%arg0: i32, %arg1: memref<1xi32, #tpu.memory_space<smem>>) -> (i32, i32) {
    %c0_i32 = arith.constant 0 : i32
    %c0_i32_0 = arith.constant 0 : i32
    return %arg0, %c0_i32 : i32, i32
  }
  func.func @transform_1(%arg0: i32, %arg1: memref<1xi32, #tpu.memory_space<smem>>) -> (i32, i32) {
    %c0_i32 = arith.constant 0 : i32
    %c0_i32_0 = arith.constant 0 : i32
    %c0_i32_1 = arith.constant 0 : i32
    return %c0_i32, %c0_i32_0 : i32, i32
  }
  func.func @transform_2(%arg0: i32, %arg1: memref<1xi32, #tpu.memory_space<smem>>) -> (i32, i32) {
    %c0_i32 = arith.constant 0 : i32
    %c0_i32_0 = arith.constant 0 : i32
    %c0_i32_1 = arith.constant 0 : i32
    return %c0_i32, %c0_i32_0 : i32, i32
  }
  func.func @transform_3(%arg0: i32, %arg1: memref<1xi32, #tpu.memory_space<smem>>) -> (i32, i32) {
    %c0_i32 = arith.constant 0 : i32
    %c0_i32_0 = arith.constant 0 : i32
    %c0_i32_1 = arith.constant 0 : i32
    return %c0_i32, %c0_i32_0 : i32, i32
  }
  func.func @transform_4(%arg0: i32, %arg1: memref<1xi32, #tpu.memory_space<smem>>) -> (i32, i32) {
    %c0_i32 = arith.constant 0 : i32
    %c0_i32_0 = arith.constant 0 : i32
    %c0_i32_1 = arith.constant 0 : i32
    return %c0_i32, %c0_i32_0 : i32, i32
  }
  func.func @transform_5(%arg0: i32, %arg1: memref<1xi32, #tpu.memory_space<smem>>) -> (i32, i32) {
    %c0_i32 = arith.constant 0 : i32
    %c0_i32_0 = arith.constant 0 : i32
    return %arg0, %c0_i32 : i32, i32
  }
}

</mosaic_0001>

<llo_original>
// kernel: tpu_custom_call.1
$region0: #{tpu_custom_call.1}
  #allocation0 [shape = 'u32[]', space=smem, size = 0x4, offset = 0x4, fixed_abs, tag = 'smem constant byte address 0x4 - core index']
  #allocation1 [shape = 'u32[144,128]{1,0:T(1,128)}', space=vmem, size = 0x12000, scoped, tag = 'internal scratch']
  #allocation2 [shape = 's32[1]{0}', space=sflag, size = 0x4, scoped, tag = 'scoped memory for tpu_custom_call.1']
  #allocation3 [shape = 's32[1]{0:T(128)S(6)}', space=smem, size = 0x200, scoped, tag = 'prefetched SMEM operand 0']
  %s0 = inlined_call_operand.<no memory space> [shape: s32[1], index: 0, kind: input, shape index: {}]
  %s1 = inlined_call_operand.hbm [shape: f32[16,32], index: 1, kind: input, shape index: {}]
  %s2 = inlined_call_operand.hbm [shape: bf16[32,256], index: 2, kind: input, shape index: {}]
  %s3 = inlined_call_operand.vmem [shape: f32[1,256], index: 3, kind: input, shape index: {}]
  %s4 = inlined_call_operand.hbm [shape: bf16[256,128], index: 4, kind: input, shape index: {}]
  %s5 = inlined_call_operand.vmem [shape: f32[1,128], index: 5, kind: input, shape index: {}]
  %s6 = inlined_call_operand.hbm [shape: f32[16,128], index: 6, kind: output, shape index: {}]
  %s7 = sld [smem:[#allocation0]]
  $region42: #{tpu_custom_call.1} parent=0
    _
  %s9 = ssub.s32 1, %s7
  %s10 = scalar_select 0, %s9, %s7
  %11 = sst [smem:[#allocation3]] %s0
  $region1: #{tpu_custom_call.1} parent=0
    #allocation4 [shape = 'u8[8192]{0}', space=vmem, size = 0x2000, scoped, tag = 'input window, operand 1, single buffered']
    #allocation5 [shape = 's32[1]{0}', space=sflag, size = 0x4, scoped, tag = 'scoped memory for tpu_custom_call.1']
    #allocation6 [shape = 's32[1]{0}', space=sflag, size = 0x4, scoped, tag = 'scoped memory for tpu_custom_call.1']
    #allocation7 [shape = 'u8[16384]{0}', space=vmem, size = 0x4000, scoped, tag = 'input window, operand 2, single buffered']
    #allocation8 [shape = 's32[1]{0}', space=sflag, size = 0x4, scoped, tag = 'scoped memory for tpu_custom_call.1']
    #allocation9 [shape = 'u8[65536]{0}', space=vmem, size = 0x10000, scoped, tag = 'input window, operand 4, single buffered']
    #allocation10 [shape = 'u8[8192]{0}', space=vmem, size = 0x2000, scoped, tag = 'output window, operand 0, single buffered']
    %12 = vsyncpa [#allocation5], 0
    %13 = vsyncpa [#allocation8], 0
    %14 = vsyncpa [#allocation6], 0
    // Predicated region
    $region2: #{tpu_custom_call.1} parent=1 // pred_check
      _
    $region3: #{tpu_custom_call.1} parent=1 // pred_check_branch
      %16 = sbr.rel (0) target = $region5
    $region4: #{tpu_custom_call.1} parent=1 // pred_region
      %s18 = ssub.s32 256, 256
      %19 = vsyncadd [#allocation5], %s18
      %s20 = sshll.u32 [#allocation4], 4
      %s21 = int_to_ptr.vmem [resolvable:$true] %s20
      %26 = dma.hbm_to_vmem [thread:$0]  %s1, 256, %s21, [#allocation5], 128, 128, 8
    $region5: #{tpu_custom_call.1} parent=1 // pred_fallthru
      _
    // Predicated region
    $region6: #{tpu_custom_call.1} parent=1 // pred_check
      _
    $region7: #{tpu_custom_call.1} parent=1 // pred_check_branch
      %28 = sbr.rel (0) target = $region9
    $region8: #{tpu_custom_call.1} parent=1 // pred_region
      %s30 = ssub.s32 512, 512
      %31 = vsyncadd [#allocation8], %s30
      %s32 = sshll.u32 [#allocation7], 4
      %s33 = int_to_ptr.vmem [resolvable:$true] %s32
      %38 = dma.hbm_to_vmem [thread:$0]  %s2, 512, %s33, [#allocation8], 128, 128, 8
    $region9: #{tpu_custom_call.1} parent=1 // pred_fallthru
      _
    // Predicated region
    $region10: #{tpu_custom_call.1} parent=1 // pred_check
      _
    $region11: #{tpu_custom_call.1} parent=1 // pred_check_branch
      %40 = sbr.rel (0) target = $region13
    $region12: #{tpu_custom_call.1} parent=1 // pred_region
      _
    $region13: #{tpu_custom_call.1} parent=1 // pred_fallthru
      _
    // Predicated region
    $region14: #{tpu_custom_call.1} parent=1 // pred_check
      _
    $region15: #{tpu_custom_call.1} parent=1 // pred_check_branch
      %42 = sbr.rel (0) target = $region17
    $region16: #{tpu_custom_call.1} parent=1 // pred_region
      %s44 = ssub.s32 2048, 2048
      %45 = vsyncadd [#allocation8], %s44
      %s46 = sshll.u32 [#allocation9], 4
      %s47 = int_to_ptr.vmem [resolvable:$true] %s46
      %52 = dma.hbm_to_vmem [thread:$0]  %s4, 2048, %s47, [#allocation8], 64, 64, 4
    $region17: #{tpu_custom_call.1} parent=1 // pred_fallthru
      _
    // Predicated region
    $region18: #{tpu_custom_call.1} parent=1 // pred_check
      _
    $region19: #{tpu_custom_call.1} parent=1 // pred_check_branch
      %54 = sbr.rel (0) target = $region21
    $region20: #{tpu_custom_call.1} parent=1 // pred_region
      _
    $region21: #{tpu_custom_call.1} parent=1 // pred_fallthru
      _
    // Predicated region
    $region22: #{tpu_custom_call.1} parent=1 // pred_check
      _
    $region23: #{tpu_custom_call.1} parent=1 // pred_check_branch
      %56 = sbr.rel (0) target = $region25
    $region24: #{tpu_custom_call.1} parent=1 // pred_region
      %57 = dma.done [#allocation5], 256
    $region25: #{tpu_custom_call.1} parent=1 // pred_fallthru
      _
    // Predicated region
    $region26: #{tpu_custom_call.1} parent=1 // pred_check
      _
    $region27: #{tpu_custom_call.1} parent=1 // pred_check_branch
      %59 = sbr.rel (0) target = $region29
    $region28: #{tpu_custom_call.1} parent=1 // pred_region
      %60 = dma.done [#allocation8], 512
    $region29: #{tpu_custom_call.1} parent=1 // pred_fallthru
      _
    // Predicated region
    $region30: #{tpu_custom_call.1} parent=1 // pred_check
      _
    $region31: #{tpu_custom_call.1} parent=1 // pred_check_branch
      %62 = sbr.rel (0) target = $region33
    $region32: #{tpu_custom_call.1} parent=1 // pred_region
      %63 = dma.done [#allocation8], 2048
    $region33: #{tpu_custom_call.1} parent=1 // pred_fallthru
      _
    %s65 = sld [smem:[#allocation3]]
    %s66 = smul.u32 0, 16
    %v67 = vld [vmem:[#allocation4] sm:$0xff]
    %v68 = vld [vmem:[#allocation4 + $0x8] sm:$0xff]
    %v69 = vpack.c.bf16 %v68, %v67
    %v70 = vld [vmem:[#allocation7] sm:$0xff]
    %v71 = vld [vmem:[#allocation7 + $0x8] sm:$0xff]
    %v72 = vld [vmem:[#allocation7 + $0x10] sm:$0xff]
    %v73 = vld [vmem:[#allocation7 + $0x18] sm:$0xff]
    %v74 = vld [vmem:[%s3] sm:$0x3]
    %v76 = vlaneseq
    %v77 = vshrl.u32 %v76, 7
    %v78 = vsub.s32 0, %v77
    %v79 = vrot.slane %v74, %v78
    %v80 = vlaneseq
    %v81 = vshrl.u32 %v80, 7
    %v82 = vsub.s32 1, %v81
    %v83 = vrot.slane %v74, %v82
    %v90 = vunpack.c.l.b16 %v70
    %v91 = vunpack.c.h.b16 %v70
    %v92 = vunpack.c.l.b16 %v71
    %v93 = vunpack.c.h.b16 %v71
    %v94 = vunpack.c.l.b16 %v72
    %v95 = vunpack.c.h.b16 %v72
    %v96 = vunpack.c.l.b16 %v73
    %v97 = vunpack.c.h.b16 %v73
    %v98 = vpack.c.b16 %v92, %v90
    %v99 = vpack.c.b16 %v93, %v91
    %v100 = vpack.c.b16 %v96, %v94
    %v101 = vpack.c.b16 %v97, %v95
    %vm106 = vcmask 261120
    %v108 = vsel %vm106, %v69, 0
    %110 = vmatprep.subr.bf16.mxu0 %v99
    %111 = vmatpush1.bf16.msra.mxu0 %v98
    %112 = vmatprep.subr.bf16.mxu0 %v101
    %113 = vmatpush1.bf16.msra.mxu0 %v100
    %114 = vmatprep.subr.bf16.mxu0 0
    %115 = vmatpush1.bf16.msra.mxu0 0
    %116 = vmatprep.subr.bf16.mxu0 0
    %117 = vmatpush1.bf16.msra.mxu0 0
    %118 = vmatprep.subr.bf16.mxu0 0
    %119 = vmatpush1.bf16.msra.mxu0 0
    %120 = vmatprep.subr.bf16.mxu0 0
    %121 = vmatpush1.bf16.msra.mxu0 0
    %122 = vmatprep.subr.bf16.mxu0 0
    %123 = vmatpush1.bf16.msra.mxu0 0
    %124 = vmatprep.subr.bf16.mxu0 0
    %125 = vmatpush1.bf16.msra.mxu0 0
    %126 = vmatprep.subr.bf16.mxu0 0
    %127 = vmatpush1.bf16.msra.mxu0 0
    %128 = vmatprep.subr.bf16.mxu0 0
    %129 = vmatpush1.bf16.msra.mxu0 0
    %130 = vmatprep.subr.bf16.mxu0 0
    %131 = vmatpush1.bf16.msra.mxu0 0
    %132 = vmatprep.subr.bf16.mxu0 0
    %133 = vmatpush1.bf16.msra.mxu0 0
    %134 = vmatprep.subr.bf16.mxu0 0
    %135 = vmatpush1.bf16.msra.mxu0 0
    %136 = vmatprep.subr.bf16.mxu0 0
    %137 = vmatpush1.bf16.msra.mxu0 0
    %138 = vmatprep.subr.bf16.mxu0 0
    %139 = vmatpush1.bf16.msra.mxu0 0
    %140 = vmatprep.subr.bf16.mxu0 0
    %141 = vmatpush1.bf16.msra.mxu0 0
    %142 = vmatprep.mubr.bf16.mxu0 0
    %143 = vmatmul.mubr.bf16.gmra.mrb[0].mxu0 %v108
    %v144 = vpop.f32.mrb[0].mxu0
    %v145 = vadd.f32 %v79, %v144
    %v146 = vpop.f32.mrb[0].mxu0
    %v147 = vadd.f32 %v83, %v146
    %v148 = vpop.f32.mrb[0].mxu0
    %v149 = vadd.f32 %v79, %v148
    %v150 = vpop.f32.mrb[0].mxu0
    %v151 = vadd.f32 %v83, %v150
    %152 = vdwg.mxu0
    %v153 = vlaneseq
    %v154 = vshrl.u32 %v153, 7
    %v155 = vadd.s32 %v154, 8
    %v156 = vstv %s66
    %v157 = vadd.s32 %v156, %v154
    %v158 = vadd.s32 %v156, %v155
    %v159 = vlaneseq
    %v160 = vand.u32 %v159, 127
    %v161 = vadd.s32 %v160, 128
    %v162 = vmul.u32 %v157, 512
    %v163 = vmul.u32 %v158, 512
    %v164 = vadd.s32 %v162, %v160
    %v165 = vadd.s32 %v162, %v161
    %v166 = vadd.s32 %v163, %v160
    %v167 = vadd.s32 %v163, %v161
    %v168 = vstv %s65
    %v169 = vxor.u32 %v164, %v168
    %v170 = vxor.u32 %v165, %v168
    %v171 = vxor.u32 %v166, %v168
    %v172 = vxor.u32 %v167, %v168
    %v173 = vmul.u32 %v169, 2654435769
    %v174 = vmul.u32 %v170, 2654435769
    %v175 = vmul.u32 %v171, 2654435769
    %v176 = vmul.u32 %v172, 2654435769
    %v177 = vshrl.u32 %v173, 16
    %v178 = vshrl.u32 %v174, 16
    %v179 = vshrl.u32 %v175, 16
    %v180 = vshrl.u32 %v176, 16
    %v181 = vxor.u32 %v173, %v177
    %v182 = vxor.u32 %v174, %v178
    %v183 = vxor.u32 %v175, %v179
    %v184 = vxor.u32 %v176, %v180
    %v185 = vmul.u32 %v181, 2246822507
    %v186 = vmul.u32 %v182, 2246822507
    %v187 = vmul.u32 %v183, 2246822507
    %v188 = vmul.u32 %v184, 2246822507
    %v189 = vshrl.u32 %v185, 13
    %v190 = vshrl.u32 %v186, 13
    %v191 = vshrl.u32 %v187, 13
    %v192 = vshrl.u32 %v188, 13
    %v193 = vxor.u32 %v185, %v189
    %v194 = vxor.u32 %v186, %v190
    %v195 = vxor.u32 %v187, %v191
    %v196 = vxor.u32 %v188, %v192
    %v197 = vmul.u32 %v193, 3266489909
    %v198 = vmul.u32 %v194, 3266489909
    %v199 = vmul.u32 %v195, 3266489909
    %v200 = vmul.u32 %v196, 3266489909
    %v201 = vshrl.u32 %v197, 16
    %v202 = vshrl.u32 %v198, 16
    %v203 = vshrl.u32 %v199, 16
    %v204 = vshrl.u32 %v200, 16
    %v205 = vxor.u32 %v197, %v201
    %v206 = vxor.u32 %v198, %v202
    %v207 = vxor.u32 %v199, %v203
    %v208 = vxor.u32 %v200, %v204
    %vm209 = vcmp.ge.u32.totalorder %v205, 2147483648
    %vm210 = vcmp.ge.u32.totalorder %v206, 2147483648
    %vm211 = vcmp.ge.u32.totalorder %v207, 2147483648
    %vm212 = vcmp.ge.u32.totalorder %v208, 2147483648
    %vm213 = vcmp.gt.f32.partialorder %v145, 0.0
    %vm214 = vcmp.gt.f32.partialorder %v147, 0.0
    %vm215 = vcmp.gt.f32.partialorder %v149, 0.0
    %vm216 = vcmp.gt.f32.partialorder %v151, 0.0
    %vm217 = vmand %vm209, %vm213
    %vm218 = vmand %vm210, %vm214
    %vm219 = vmand %vm211, %vm215
    %vm220 = vmand %vm212, %vm216
    %v221 = vsel %vm217, %v145, 0.0
    %v222 = vsel %vm218, %v147, 0.0
    %v223 = vsel %vm219, %v149, 0.0
    %v224 = vsel %vm220, %v151, 0.0
    %v225 = vpack.c.bf16 %v223, %v221
    %v226 = vpack.c.bf16 %v224, %v222
    %v227 = vld [vmem:[#allocation9] sm:$0xf]
    %v228 = vld [vmem:[#allocation9 + $0x4] sm:$0xf]
    %v229 = vld [vmem:[#allocation9 + $0x8] sm:$0xf]
    %v230 = vld [vmem:[#allocation9 + $0xc] sm:$0xf]
    %v231 = vld [vmem:[#allocation9 + $0x10] sm:$0xf]
    %v232 = vld [vmem:[#allocation9 + $0x14] sm:$0xf]
    %v233 = vld [vmem:[#allocation9 + $0x18] sm:$0xf]
    %v234 = vld [vmem:[#allocation9 + $0x1c] sm:$0xf]
    %v235 = vld [vmem:[#allocation9 + $0x20] sm:$0xf]
    %v236 = vld [vmem:[#allocation9 + $0x24] sm:$0xf]
    %v237 = vld [vmem:[#allocation9 + $0x28] sm:$0xf]
    %v238 = vld [vmem:[#allocation9 + $0x2c] sm:$0xf]
    %v239 = vld [vmem:[#allocation9 + $0x30] sm:$0xf]
    %v240 = vld [vmem:[#allocation9 + $0x34] sm:$0xf]
    %v241 = vld [vmem:[#allocation9 + $0x38] sm:$0xf]
    %v242 = vld [vmem:[#allocation9 + $0x3c] sm:$0xf]
    %v243 = vld [vmem:[#allocation9 + $0x40] sm:$0xf]
    %v244 = vld [vmem:[#allocation9 + $0x44] sm:$0xf]
    %v245 = vld [vmem:[#allocation9 + $0x48] sm:$0xf]
    %v246 = vld [vmem:[#allocation9 + $0x4c] sm:$0xf]
    %v247 = vld [vmem:[#allocation9 + $0x50] sm:$0xf]
    %v248 = vld [vmem:[#allocation9 + $0x54] sm:$0xf]
    %v249 = vld [vmem:[#allocation9 + $0x58] sm:$0xf]
    %v250 = vld [vmem:[#allocation9 + $0x5c] sm:$0xf]
    %v251 = vld [vmem:[#allocation9 + $0x60] sm:$0xf]
    %v252 = vld [vmem:[#allocation9 + $0x64] sm:$0xf]
    %v253 = vld [vmem:[#allocation9 + $0x68] sm:$0xf]
    %v254 = vld [vmem:[#allocation9 + $0x6c] sm:$0xf]
    %v255 = vld [vmem:[#allocation9 + $0x70] sm:$0xf]
    %v256 = vld [vmem:[#allocation9 + $0x74] sm:$0xf]
    %v257 = vld [vmem:[#allocation9 + $0x78] sm:$0xf]
    %v258 = vld [vmem:[#allocation9 + $0x7c] sm:$0xf]
    %v259 = vld [vmem:[%s5] sm:$0x1]
    %v261 = vlaneseq
    %v262 = vshrl.u32 %v261, 7
    %v263 = vsub.s32 0, %v262
    %v264 = vrot.slane %v259, %v263
    %v298 = vunpack.c.l.b16 %v227
    %v299 = vunpack.c.l.b16 %v228
    %v300 = vunpack.c.l.b16 %v229
    %v301 = vunpack.c.l.b16 %v230
    %v302 = vunpack.c.l.b16 %v231
    %v303 = vunpack.c.l.b16 %v232
    %v304 = vunpack.c.l.b16 %v233
    %v305 = vunpack.c.l.b16 %v234
    %v306 = vunpack.c.l.b16 %v235
    %v307 = vunpack.c.l.b16 %v236
    %v308 = vunpack.c.l.b16 %v237
    %v309 = vunpack.c.l.b16 %v238
    %v310 = vunpack.c.l.b16 %v239
    %v311 = vunpack.c.l.b16 %v240
    %v312 = vunpack.c.l.b16 %v241
    %v313 = vunpack.c.l.b16 %v242
    %v314 = vunpack.c.l.b16 %v243
    %v315 = vunpack.c.l.b16 %v244
    %v316 = vunpack.c.l.b16 %v245
    %v317 = vunpack.c.l.b16 %v246
    %v318 = vunpack.c.l.b16 %v247
    %v319 = vunpack.c.l.b16 %v248
    %v320 = vunpack.c.l.b16 %v249
    %v321 = vunpack.c.l.b16 %v250
    %v322 = vunpack.c.l.b16 %v251
    %v323 = vunpack.c.l.b16 %v252
    %v324 = vunpack.c.l.b16 %v253
    %v325 = vunpack.c.l.b16 %v254
    %v326 = vunpack.c.l.b16 %v255
    %v327 = vunpack.c.l.b16 %v256
    %v328 = vunpack.c.l.b16 %v257
    %v329 = vunpack.c.l.b16 %v258
    %v330 = vpack.c.b16 %v299, %v298
    %v331 = vpack.c.b16 %v301, %v300
    %v332 = vpack.c.b16 %v303, %v302
    %v333 = vpack.c.b16 %v305, %v304
    %v334 = vpack.c.b16 %v307, %v306
    %v335 = vpack.c.b16 %v309, %v308
    %v336 = vpack.c.b16 %v311, %v310
    %v337 = vpack.c.b16 %v313, %v312
    %v338 = vpack.c.b16 %v315, %v314
    %v339 = vpack.c.b16 %v317, %v316
    %v340 = vpack.c.b16 %v319, %v318
    %v341 = vpack.c.b16 %v321, %v320
    %v342 = vpack.c.b16 %v323, %v322
    %v343 = vpack.c.b16 %v325, %v324
    %v344 = vpack.c.b16 %v327, %v326
    %v345 = vpack.c.b16 %v329, %v328
    %362 = vmatprep.subr.bf16.mxu0 0
    %363 = vmatpush1.bf16.msra.mxu0 %v330
    %364 = vmatprep.subr.bf16.mxu0 0
    %365 = vmatpush1.bf16.msra.mxu0 %v331
    %366 = vmatprep.subr.bf16.mxu0 0
    %367 = vmatpush1.bf16.msra.mxu0 %v332
    %368 = vmatprep.subr.bf16.mxu0 0
    %369 = vmatpush1.bf16.msra.mxu0 %v333
    %370 = vmatprep.subr.bf16.mxu0 0
    %371 = vmatpush1.bf16.msra.mxu0 %v334
    %372 = vmatprep.subr.bf16.mxu0 0
    %373 = vmatpush1.bf16.msra.mxu0 %v335
    %374 = vmatprep.subr.bf16.mxu0 0
    %375 = vmatpush1.bf16.msra.mxu0 %v336
    %376 = vmatprep.subr.bf16.mxu0 0
    %377 = vmatpush1.bf16.msra.mxu0 %v337
    %378 = vmatprep.subr.bf16.mxu0 0
    %379 = vmatpush1.bf16.msra.mxu0 %v338
    %380 = vmatprep.subr.bf16.mxu0 0
    %381 = vmatpush1.bf16.msra.mxu0 %v339
    %382 = vmatprep.subr.bf16.mxu0 0
    %383 = vmatpush1.bf16.msra.mxu0 %v340
    %384 = vmatprep.subr.bf16.mxu0 0
    %385 = vmatpush1.bf16.msra.mxu0 %v341
    %386 = vmatprep.subr.bf16.mxu0 0
    %387 = vmatpush1.bf16.msra.mxu0 %v342
    %388 = vmatprep.subr.bf16.mxu0 0
    %389 = vmatpush1.bf16.msra.mxu0 %v343
    %390 = vmatprep.subr.bf16.mxu0 0
    %391 = vmatpush1.bf16.msra.mxu0 %v344
    %392 = vmatprep.subr.bf16.mxu0 0
    %393 = vmatpush1.bf16.msra.mxu0 %v345
    %394 = vmatprep.mubr.bf16.mxu0 %v226
    %395 = vmatmul.mubr.bf16.gmra.mrb[0].mxu0 %v225
    %v396 = vpop.f32.mrb[0].mxu0
    %v397 = vadd.f32 %v264, %v396
    %v398 = vpop.f32.mrb[0].mxu0
    %v399 = vpop.f32.mrb[0].mxu0
    %v400 = vadd.f32 %v264, %v399
    %v401 = vpop.f32.mrb[0].mxu0
    %402 = vdwg.mxu0
    %v403 = vadd.s32 %v164, 256
    %v404 = vadd.s32 %v166, 256
    %v405 = vxor.u32 %v403, %v168
    %v406 = vxor.u32 %v404, %v168
    %v407 = vmul.u32 %v405, 2654435769
    %v408 = vmul.u32 %v406, 2654435769
    %v409 = vshrl.u32 %v407, 16
    %v410 = vshrl.u32 %v408, 16
    %v411 = vxor.u32 %v407, %v409
    %v412 = vxor.u32 %v408, %v410
    %v413 = vmul.u32 %v411, 2246822507
    %v414 = vmul.u32 %v412, 2246822507
    %v415 = vshrl.u32 %v413, 13
    %v416 = vshrl.u32 %v414, 13
    %v417 = vxor.u32 %v413, %v415
    %v418 = vxor.u32 %v414, %v416
    %v419 = vmul.u32 %v417, 3266489909
    %v420 = vmul.u32 %v418, 3266489909
    %v421 = vshrl.u32 %v419, 16
    %v422 = vshrl.u32 %v420, 16
    %v423 = vxor.u32 %v419, %v421
    %v424 = vxor.u32 %v420, %v422
    %vm425 = vcmp.ge.u32.totalorder %v423, 2147483648
    %vm426 = vcmp.ge.u32.totalorder %v424, 2147483648
    %vm427 = vcmp.gt.f32.partialorder %v397, 0.0
    %vm428 = vcmp.gt.f32.partialorder %v400, 0.0
    %vm429 = vmand %vm425, %vm427
    %vm430 = vmand %vm426, %vm428
    %v431 = vmul.f32 %v397, 2.0
    %v432 = vmul.f32 %v400, 2.0
    %v433 = vsel %vm429, %v431, 0.0
    %v434 = vsel %vm430, %v432, 0.0
    %435 = vst [vmem:[#allocation10] sm:$0xff] %v433
    %436 = vst [vmem:[#allocation10 + $0x8] sm:$0xff] %v434
    // Predicated region
    $region34: #{tpu_custom_call.1} parent=1 // pred_check
      _
    $region35: #{tpu_custom_call.1} parent=1 // pred_check_branch
      %438 = sbr.rel (0) target = $region37
    $region36: #{tpu_custom_call.1} parent=1 // pred_region
      %s440 = ssub.s32 256, 256
      %441 = vsyncadd [#allocation6], %s440
      %s442 = sshll.u32 [#allocation10], 4
      %s443 = int_to_ptr.vmem [resolvable:$true] %s442
      %448 = dma.vmem_to_hbm [thread:$0]  %s443, 256, %s6, [#allocation6], 128, 128, 8
    $region37: #{tpu_custom_call.1} parent=1 // pred_fallthru
      _
    // Predicated region
    $region38: #{tpu_custom_call.1} parent=1 // pred_check
      _
    $region39: #{tpu_custom_call.1} parent=1 // pred_check_branch
      %450 = sbr.rel (0) target = $region41
    $region40: #{tpu_custom_call.1} parent=1 // pred_region
      %451 = dma.done [#allocation6], 256
    $region41: #{tpu_custom_call.1} parent=1 // pred_fallthru
      _
    %452 = vsyncpa [#allocation5], 1
    %453 = vsyncpa [#allocation8], 1
    %454 = vsyncpa [#allocation6], 1

</llo_original>
